<compile_context>
chip_gen: v5e
topology: v5e:2x2
jax: 0.10.0
libtpu: 0.0.40
codegen_flags: <defaults>
</compile_context>

<pallas_src>
import functools

import jax
import jax.numpy as jnp
from jax import lax
from jax.experimental import pallas as pl
from jax.experimental.pallas import tpu as pltpu


# ---------------------------------------------------------------------------
# Kernel 1: input projection for all timesteps (fully parallel over time).
#   gates_x[m, :] = x_flat[m, :] @ W_ih^T + (b_ih + b_hh)
# ---------------------------------------------------------------------------
def input_proj_kernel(x_ref, wih_ref, b_ref, out_ref):
    out_ref[...] = (
        jnp.dot(x_ref[...], wih_ref[...], preferred_element_type=jnp.float32)
        + b_ref[...]
    )


# ---------------------------------------------------------------------------
# Kernel 2: the recurrence. One grid step = T_blk timesteps.
#   h lives resident in the output block (constant index_map), c in VMEM scratch.
# ---------------------------------------------------------------------------
def lstm_recurrent_kernel(gx_ref, whh_ref, h_ref, c_ref, *, t_blk):
    blk = pl.program_id(0)

    @pl.when(blk == 0)
    def _():
        h_ref[...] = jnp.zeros_like(h_ref)   # h0 = 0 (torch default)
        c_ref[...] = jnp.zeros_like(c_ref)   # c0 = 0

    whh = whh_ref[...]                       # (H_pad, 4*H_pad), resident
    hp = h_ref.shape[-1]

    def step(tt, carry):
        h_prev, c_prev = carry
        # gates_x already contains x_t @ W_ih^T + bias.
        gates = gx_ref[tt] + jnp.dot(h_prev, whh,
                                     preferred_element_type=jnp.float32)
        i_g = jax.nn.sigmoid(gates[:, 0 * hp:1 * hp])
        f_g = jax.nn.sigmoid(gates[:, 1 * hp:2 * hp])
        g_g = jnp.tanh(gates[:, 2 * hp:3 * hp])
        o_g = jax.nn.sigmoid(gates[:, 3 * hp:4 * hp])
        c_new = f_g * c_prev + i_g * g_g
        h_new = o_g * jnp.tanh(c_new)
        return (h_new, c_new)

    h_fin, c_fin = lax.fori_loop(0, t_blk, step, (h_ref[...], c_ref[...]),
                                 unroll=True)
    h_ref[...] = h_fin                       # single h store per T_blk timesteps
    c_ref[...] = c_fin


# ---------------------------------------------------------------------------
# Wrapper
# ---------------------------------------------------------------------------
def _round_up(x, m):
    return ((x + m - 1) // m) * m


def _pad_axis(a, axis, new_size):
    pads = [(0, 0)] * a.ndim
    pads[axis] = (0, new_size - a.shape[axis])
    return jnp.pad(a, pads)


def _pick_time_block(seq_len):
    for tb in (32, 16, 8, 4, 2, 1):
        if seq_len % tb == 0:
            return tb
    return 1


def lstm_forward(x, w_ih, w_hh, b_ih, b_hh):
    """x: (B, S, D) float32. Returns last hidden state (B, H), matching
    torch LSTM(batch_first=True) output[:, -1] with zero initial state."""
    B, S, D = x.shape
    H = w_hh.shape[1]

    B_pad = max(_round_up(B, 8), 8)          # sublane-aligned batch
    H_pad = max(_round_up(H, 128), 128)      # lane-aligned hidden
    G = 4 * H_pad
    T_blk = _pick_time_block(S)

    # ---- lane-aligned, gate-padded weights / bias ----
    wih_t = _pad_axis(w_ih.T.reshape(D, 4, H), 2, H_pad).reshape(D, G)        # (D, G)
    whh_t = _pad_axis(_pad_axis(w_hh.T.reshape(H, 4, H), 2, H_pad), 0, H_pad)
    whh_t = whh_t.reshape(H_pad, G)                                           # (H_pad, G)
    bias = _pad_axis((b_ih + b_hh).reshape(4, H), 1, H_pad).reshape(1, G)     # (1, G)

    # ---- time-major, batch-padded input ----
    x_tm = _pad_axis(jnp.transpose(x, (1, 0, 2)), 1, B_pad)                   # (S, B_pad, D)
    x_flat = x_tm.reshape(S * B_pad, D)

    # ---- 1) hoisted input projection: one big parallel matmul ----
    M = S * B_pad
    M_blk = T_blk * B_pad
    gx_flat = pl.pallas_call(
        input_proj_kernel,
        out_shape=jax.ShapeDtypeStruct((M, G), jnp.float32),
        grid_spec=pltpu.PrefetchScalarGridSpec(
            num_scalar_prefetch=0,
            grid=(M // M_blk,),
            in_specs=[
                pl.BlockSpec((M_blk, D), lambda m: (m, 0)),    # x rows
                pl.BlockSpec((D, G), lambda m: (0, 0)),        # W_ih^T (resident)
                pl.BlockSpec((1, G), lambda m: (0, 0)),        # bias   (resident)
            ],
            out_specs=pl.BlockSpec((M_blk, G), lambda m: (m, 0)),
        ),
        compiler_params=pltpu.CompilerParams(
            dimension_semantics=("parallel",),
        ),
    )(x_flat, wih_t, bias)
    gates_x = gx_flat.reshape(S, B_pad, G)

    # ---- 2) sequential recurrence, T_blk timesteps per grid step ----
    h_last = pl.pallas_call(
        functools.partial(lstm_recurrent_kernel, t_blk=T_blk),
        out_shape=jax.ShapeDtypeStruct((B_pad, H_pad), jnp.float32),
        grid_spec=pltpu.PrefetchScalarGridSpec(
            num_scalar_prefetch=0,
            grid=(S // T_blk,),
            in_specs=[
                pl.BlockSpec((T_blk, B_pad, G), lambda b: (b, 0, 0)),  # gates_x slab
                pl.BlockSpec((H_pad, G), lambda b: (0, 0)),            # W_hh^T (resident)
            ],
            out_specs=pl.BlockSpec((B_pad, H_pad), lambda b: (0, 0)),  # resident h state
            scratch_shapes=[
                pltpu.VMEM((B_pad, H_pad), jnp.float32),               # c state
            ],
        ),
        compiler_params=pltpu.CompilerParams(
            dimension_semantics=("arbitrary",),   # serial recurrence over time blocks
        ),
    )(gates_x, whh_t)

    return h_last[:B, :H]


# ---------------------------------------------------------------------------
# Pure-JAX reference (torch.nn.LSTM semantics) for validation.
# ---------------------------------------------------------------------------
def lstm_reference(x, w_ih, w_hh, b_ih, b_hh):
    B, S, D = x.shape
    H = w_hh.shape[1]

    def step(carry, x_t):
        h, c = carry
        gates = x_t @ w_ih.T + h @ w_hh.T + b_ih + b_hh
        i, f, g, o = jnp.split(gates, 4, axis=-1)
        i, f, o = jax.nn.sigmoid(i), jax.nn.sigmoid(f), jax.nn.sigmoid(o)
        g = jnp.tanh(g)
        c = f * c + i * g
        h = o * jnp.tanh(c)
        return (h, c), h

    h0 = jnp.zeros((B, H), jnp.float32)
    c0 = jnp.zeros((B, H), jnp.float32)
    (_, _), hs = lax.scan(step, (h0, c0), jnp.transpose(x, (1, 0, 2)))
    return hs[-1]


if __name__ == "__main__":
    # Small shapes consistent with the module: batch=2, seq=8, input_dim=4, hidden=32.
    B, S, D, H = 2, 8, 4, 32

    key = jax.random.PRNGKey(0)
    k_x, k_wih, k_whh, k_bih, k_bhh = jax.random.split(key, 5)

    # torch.nn.LSTM-style init: uniform(-1/sqrt(H), 1/sqrt(H)).
    bound = 1.0 / jnp.sqrt(jnp.float32(H))
    x = jax.random.normal(k_x, (B, S, D), dtype=jnp.float32)
    w_ih = jax.random.uniform(k_wih, (4 * H, D), jnp.float32, -bound, bound)
    w_hh = jax.random.uniform(k_whh, (4 * H, H), jnp.float32, -bound, bound)
    b_ih = jax.random.uniform(k_bih, (4 * H,), jnp.float32, -bound, bound)
    b_hh = jax.random.uniform(k_bhh, (4 * H,), jnp.float32, -bound, bound)

    out = lstm_forward(x, w_ih, w_hh, b_ih, b_hh)
    out = jax.block_until_ready(out)

    ref = lstm_reference(x, w_ih, w_hh, b_ih, b_hh)
    assert out.shape == (B, H), out.shape
    assert jnp.allclose(out, ref, atol=1e-5, rtol=1e-5), "mismatch vs reference"

    # TODO(synk): torch allows a user-provided (h0, c0); this kernel assumes the
    # default zero initial state, matching the module's forward as written.
    print("KERNEL_OK")
</pallas_src>

<mosaic_0001>
module attributes {stable_mosaic.version = 11 : i64} {
  func.func @input_proj_kernel(%arg0: i32, %arg1: memref<64x4xf32, #tpu.memory_space<vmem>>, %arg2: memref<4x512xf32, #tpu.memory_space<vmem>>, %arg3: memref<1x512xf32, #tpu.memory_space<vmem>>, %arg4: memref<64x512xf32, #tpu.memory_space<vmem>>) attributes {dimension_semantics = [#tpu.dimension_semantics<parallel>], iteration_bounds = array<i64: 1>, scalar_prefetch = 0 : i64, scratch_operands = 0 : i64, tpu.core_type = #tpu.core_type<tc>, window_params = [{transform_indices = @transform_0, window_bounds = array<i64: 64, 4>}, {pipeline_mode = #tpu.pipeline_mode<synchronous>, transform_indices = @transform_1, window_bounds = array<i64: 4, 512>}, {pipeline_mode = #tpu.pipeline_mode<synchronous>, transform_indices = @transform_2, window_bounds = array<i64: 1, 512>}, {transform_indices = @transform_3, window_bounds = array<i64: 64, 512>}]} {
    %c0 = arith.constant 0 : index
    %c0_0 = arith.constant 0 : index
    %0 = vector.load %arg1[%c0, %c0_0] : memref<64x4xf32, #tpu.memory_space<vmem>>, vector<64x4xf32>
    %c0_1 = arith.constant 0 : index
    %c0_2 = arith.constant 0 : index
    %1 = vector.load %arg2[%c0_1, %c0_2] : memref<4x512xf32, #tpu.memory_space<vmem>>, vector<4x512xf32>
    %cst = arith.constant dense<0.000000e+00> : vector<64x512xf32>
    %2 = tpu.matmul %0, %1, %cst {dimension_numbers = #tpu.dot_dimension_numbers<[1], [0], [0], [1], [0, 0, 1, 1], [], []>} : vector<64x4xf32>, vector<4x512xf32>, vector<64x512xf32> -> vector<64x512xf32>
    %c0_3 = arith.constant 0 : index
    %c0_4 = arith.constant 0 : index
    %3 = vector.load %arg3[%c0_3, %c0_4] : memref<1x512xf32, #tpu.memory_space<vmem>>, vector<1x512xf32>
    %4 = vector.broadcast %3 : vector<1x512xf32> to vector<64x512xf32>
    %5 = arith.addf %2, %4 : vector<64x512xf32>
    %c0_5 = arith.constant 0 : index
    %c0_6 = arith.constant 0 : index
    %6 = vector.load %arg4[%c0_5, %c0_6] : memref<64x512xf32, #tpu.memory_space<vmem>>, vector<64x512xf32>
    tpu.vector_store %arg4[%c0_5, %c0_6], %5 {strides = array<i32>} : memref<64x512xf32, #tpu.memory_space<vmem>>, vector<64x512xf32>,
    return
  }
  func.func @transform_0(%arg0: i32) -> (i32, i32) {
    %c0_i32 = arith.constant 0 : i32
    %c0_i32_0 = arith.constant 0 : i32
    return %arg0, %c0_i32 : i32, i32
  }
  func.func @transform_1(%arg0: i32) -> (i32, i32) {
    %c0_i32 = arith.constant 0 : i32
    %c0_i32_0 = arith.constant 0 : i32
    %c0_i32_1 = arith.constant 0 : i32
    return %c0_i32, %c0_i32_0 : i32, i32
  }
  func.func @transform_2(%arg0: i32) -> (i32, i32) {
    %c0_i32 = arith.constant 0 : i32
    %c0_i32_0 = arith.constant 0 : i32
    %c0_i32_1 = arith.constant 0 : i32
    return %c0_i32, %c0_i32_0 : i32, i32
  }
  func.func @transform_3(%arg0: i32) -> (i32, i32) {
    %c0_i32 = arith.constant 0 : i32
    %c0_i32_0 = arith.constant 0 : i32
    return %arg0, %c0_i32 : i32, i32
  }
}

</mosaic_0001>

<llo_original>
// kernel: tpu_custom_call.1
$region0: #{tpu_custom_call.1}
  #allocation0 [shape = 'u32[]', space=smem, size = 0x4, offset = 0x4, fixed_abs, tag = 'smem constant byte address 0x4 - core index']
  #allocation1 [shape = 'u32[72,128]{1,0:T(1,128)}', space=vmem, size = 0x9000, scoped, tag = 'internal scratch']
  %s0 = inlined_call_operand.vmem [shape: f32[64,4], index: 0, kind: input, shape index: {}]
  %s1 = inlined_call_operand.vmem [shape: f32[4,512], index: 1, kind: input, shape index: {}]
  %s2 = inlined_call_operand.vmem [shape: f32[1,512], index: 2, kind: input, shape index: {}]
  %s3 = inlined_call_operand.hbm [shape: f32[64,512], index: 3, kind: output, shape index: {}]
  %s4 = sld [smem:[#allocation0]]
  $region22: #{tpu_custom_call.1} parent=0
    _
  %s6 = ssub.s32 1, %s4
  %s7 = scalar_select 0, %s6, %s4
  $region1: #{tpu_custom_call.1} parent=0
    #allocation2 [shape = 'u8[131072]{0}', space=vmem, size = 0x20000, scoped, tag = 'output window, operand 0, single buffered']
    #allocation3 [shape = 's32[1]{0}', space=sflag, size = 0x4, scoped, tag = 'scoped memory for tpu_custom_call.1']
    %8 = vsyncpa [#allocation3], 0
    // Predicated region
    $region2: #{tpu_custom_call.1} parent=1 // pred_check
      _
    $region3: #{tpu_custom_call.1} parent=1 // pred_check_branch
      %10 = sbr.rel (0) target = $region5
    $region4: #{tpu_custom_call.1} parent=1 // pred_region
      _
    $region5: #{tpu_custom_call.1} parent=1 // pred_fallthru
      _
    // Predicated region
    $region6: #{tpu_custom_call.1} parent=1 // pred_check
      _
    $region7: #{tpu_custom_call.1} parent=1 // pred_check_branch
      %12 = sbr.rel (0) target = $region9
    $region8: #{tpu_custom_call.1} parent=1 // pred_region
      _
    $region9: #{tpu_custom_call.1} parent=1 // pred_fallthru
      _
    // Predicated region
    $region10: #{tpu_custom_call.1} parent=1 // pred_check
      _
    $region11: #{tpu_custom_call.1} parent=1 // pred_check_branch
      %14 = sbr.rel (0) target = $region13
    $region12: #{tpu_custom_call.1} parent=1 // pred_region
      _
    $region13: #{tpu_custom_call.1} parent=1 // pred_fallthru
      _
    %v15 = vld [vmem:[%s0] sm:$0xff]
    %v16 = vld [vmem:[%s0 + $0x8] sm:$0xff]
    %v17 = vld [vmem:[%s0 + $0x10] sm:$0xff]
    %v18 = vld [vmem:[%s0 + $0x18] sm:$0xff]
    %v19 = vld [vmem:[%s0 + $0x20] sm:$0xff]
    %v20 = vld [vmem:[%s0 + $0x28] sm:$0xff]
    %v21 = vld [vmem:[%s0 + $0x30] sm:$0xff]
    %v22 = vld [vmem:[%s0 + $0x38] sm:$0xff]
    %v23 = vld [vmem:[%s1] sm:$0xff]
    %v24 = vld [vmem:[%s1 + $0x8] sm:$0xff]
    %v25 = vld [vmem:[%s2] sm:$0xf]
    %v27 = vperm.slane %v25, 0
    %v28 = vperm.slane %v25, 1
    %v29 = vperm.slane %v25, 2
    %v30 = vperm.slane %v25, 3
    %37 = vst [vmem:[#allocation1] ss:$2 sm:$0xff] %v23
    %s38 = scalar_lea.vmem [#allocation1], 16
    %39 = vst [vmem:[%s38] ss:$2 sm:$0xff] %v24
    %v40 = vld.sshfl [vmem:[#allocation1] sm:$0xff pattern:$0x75316420]
    %v41 = vld.sshfl [vmem:[#allocation1 + $0x8] sm:$0xff pattern:$0x75316420]
    %v42 = vld.sshfl [vmem:[#allocation1 + $0x10] sm:$0xff pattern:$0x75316420]
    %v43 = vld.sshfl [vmem:[#allocation1 + $0x18] sm:$0xff pattern:$0x75316420]
    %vm44 = vcmask 31744
    %v46 = vsel %vm44, %v15, 0
    %v49 = vsel %vm44, %v16, 0
    %v52 = vsel %vm44, %v17, 0
    %v55 = vsel %vm44, %v18, 0
    %v58 = vsel %vm44, %v19, 0
    %v61 = vsel %vm44, %v20, 0
    %v64 = vsel %vm44, %v21, 0
    %v67 = vsel %vm44, %v22, 0
    %vm69 = vcmask 1043456
    %v70 = vsel %vm69, %v40, 0
    %v72 = vsel %vm69, %v41, 0
    %v74 = vsel %vm69, %v42, 0
    %v76 = vsel %vm69, %v43, 0
    %78 = vmatpush.msra.mxu0 0.0
    %79 = vmatpush.msra.mxu0 0.0
    %80 = vmatpush.msra.mxu0 0.0
    %81 = vmatpush.msra.mxu0 0.0
    %82 = vmatpush.msra.mxu0 0.0
    %83 = vmatpush.msra.mxu0 0.0
    %84 = vmatpush.msra.mxu0 0.0
    %85 = vmatpush.msra.mxu0 0.0
    %86 = vmatpush.msra.mxu0 0.0
    %87 = vmatpush.msra.mxu0 0.0
    %88 = vmatpush.msra.mxu0 0.0
    %89 = vmatpush.msra.mxu0 0.0
    %90 = vmatpush.msra.mxu0 0.0
    %91 = vmatpush.msra.mxu0 0.0
    %92 = vmatpush.msra.mxu0 0.0
    %93 = vmatpush.msra.mxu0 %v70
    %94 = vmatmul.f32.gmra.mxu0 %v46
    %v95 = vpop.f32.mrf.mxu0
    %v96 = vadd.f32 %v27, %v95
    %97 = vmatmul.f32.gmra.mxu0 %v49
    %v98 = vpop.f32.mrf.mxu0
    %v99 = vadd.f32 %v27, %v98
    %100 = vmatmul.f32.gmra.mxu0 %v52
    %v101 = vpop.f32.mrf.mxu0
    %v102 = vadd.f32 %v27, %v101
    %103 = vmatmul.f32.gmra.mxu0 %v55
    %v104 = vpop.f32.mrf.mxu0
    %v105 = vadd.f32 %v27, %v104
    %106 = vmatmul.f32.gmra.mxu0 %v58
    %v107 = vpop.f32.mrf.mxu0
    %v108 = vadd.f32 %v27, %v107
    %109 = vmatmul.f32.gmra.mxu0 %v61
    %v110 = vpop.f32.mrf.mxu0
    %v111 = vadd.f32 %v27, %v110
    %112 = vmatmul.f32.gmra.mxu0 %v64
    %v113 = vpop.f32.mrf.mxu0
    %v114 = vadd.f32 %v27, %v113
    %115 = vmatmul.f32.gmra.mxu0 %v67
    %v116 = vpop.f32.mrf.mxu0
    %v117 = vadd.f32 %v27, %v116
    %118 = vdwg.mxu0
    %119 = vmatpush.msra.mxu0 0.0
    %120 = vmatpush.msra.mxu0 0.0
    %121 = vmatpush.msra.mxu0 0.0
    %122 = vmatpush.msra.mxu0 0.0
    %123 = vmatpush.msra.mxu0 0.0
    %124 = vmatpush.msra.mxu0 0.0
    %125 = vmatpush.msra.mxu0 0.0
    %126 = vmatpush.msra.mxu0 0.0
    %127 = vmatpush.msra.mxu0 0.0
    %128 = vmatpush.msra.mxu0 0.0
    %129 = vmatpush.msra.mxu0 0.0
    %130 = vmatpush.msra.mxu0 0.0
    %131 = vmatpush.msra.mxu0 0.0
    %132 = vmatpush.msra.mxu0 0.0
    %133 = vmatpush.msra.mxu0 0.0
    %134 = vmatpush.msra.mxu0 %v72
    %135 = vmatmul.f32.gmra.mxu0 %v46
    %v136 = vpop.f32.mrf.mxu0
    %v137 = vadd.f32 %v28, %v136
    %138 = vmatmul.f32.gmra.mxu0 %v49
    %v139 = vpop.f32.mrf.mxu0
    %v140 = vadd.f32 %v28, %v139
    %141 = vmatmul.f32.gmra.mxu0 %v52
    %v142 = vpop.f32.mrf.mxu0
    %v143 = vadd.f32 %v28, %v142
    %144 = vmatmul.f32.gmra.mxu0 %v55
    %v145 = vpop.f32.mrf.mxu0
    %v146 = vadd.f32 %v28, %v145
    %147 = vmatmul.f32.gmra.mxu0 %v58
    %v148 = vpop.f32.mrf.mxu0
    %v149 = vadd.f32 %v28, %v148
    %150 = vmatmul.f32.gmra.mxu0 %v61
    %v151 = vpop.f32.mrf.mxu0
    %v152 = vadd.f32 %v28, %v151
    %153 = vmatmul.f32.gmra.mxu0 %v64
    %v154 = vpop.f32.mrf.mxu0
    %v155 = vadd.f32 %v28, %v154
    %156 = vmatmul.f32.gmra.mxu0 %v67
    %v157 = vpop.f32.mrf.mxu0
    %v158 = vadd.f32 %v28, %v157
    %159 = vdwg.mxu0
    %160 = vmatpush.msra.mxu0 0.0
    %161 = vmatpush.msra.mxu0 0.0
    %162 = vmatpush.msra.mxu0 0.0
    %163 = vmatpush.msra.mxu0 0.0
    %164 = vmatpush.msra.mxu0 0.0
    %165 = vmatpush.msra.mxu0 0.0
    %166 = vmatpush.msra.mxu0 0.0
    %167 = vmatpush.msra.mxu0 0.0
    %168 = vmatpush.msra.mxu0 0.0
    %169 = vmatpush.msra.mxu0 0.0
    %170 = vmatpush.msra.mxu0 0.0
    %171 = vmatpush.msra.mxu0 0.0
    %172 = vmatpush.msra.mxu0 0.0
    %173 = vmatpush.msra.mxu0 0.0
    %174 = vmatpush.msra.mxu0 0.0
    %175 = vmatpush.msra.mxu0 %v74
    %176 = vmatmul.f32.gmra.mxu0 %v46
    %v177 = vpop.f32.mrf.mxu0
    %v178 = vadd.f32 %v29, %v177
    %179 = vmatmul.f32.gmra.mxu0 %v49
    %v180 = vpop.f32.mrf.mxu0
    %v181 = vadd.f32 %v29, %v180
    %182 = vmatmul.f32.gmra.mxu0 %v52
    %v183 = vpop.f32.mrf.mxu0
    %v184 = vadd.f32 %v29, %v183
    %185 = vmatmul.f32.gmra.mxu0 %v55
    %v186 = vpop.f32.mrf.mxu0
    %v187 = vadd.f32 %v29, %v186
    %188 = vmatmul.f32.gmra.mxu0 %v58
    %v189 = vpop.f32.mrf.mxu0
    %v190 = vadd.f32 %v29, %v189
    %191 = vmatmul.f32.gmra.mxu0 %v61
    %v192 = vpop.f32.mrf.mxu0
    %v193 = vadd.f32 %v29, %v192
    %194 = vmatmul.f32.gmra.mxu0 %v64
    %v195 = vpop.f32.mrf.mxu0
    %v196 = vadd.f32 %v29, %v195
    %197 = vmatmul.f32.gmra.mxu0 %v67
    %v198 = vpop.f32.mrf.mxu0
    %v199 = vadd.f32 %v29, %v198
    %200 = vdwg.mxu0
    %201 = vmatpush.msra.mxu0 0.0
    %202 = vmatpush.msra.mxu0 0.0
    %203 = vmatpush.msra.mxu0 0.0
    %204 = vmatpush.msra.mxu0 0.0
    %205 = vmatpush.msra.mxu0 0.0
    %206 = vmatpush.msra.mxu0 0.0
    %207 = vmatpush.msra.mxu0 0.0
    %208 = vmatpush.msra.mxu0 0.0
    %209 = vmatpush.msra.mxu0 0.0
    %210 = vmatpush.msra.mxu0 0.0
    %211 = vmatpush.msra.mxu0 0.0
    %212 = vmatpush.msra.mxu0 0.0
    %213 = vmatpush.msra.mxu0 0.0
    %214 = vmatpush.msra.mxu0 0.0
    %215 = vmatpush.msra.mxu0 0.0
    %216 = vmatpush.msra.mxu0 %v76
    %217 = vmatmul.f32.gmra.mxu0 %v46
    %v218 = vpop.f32.mrf.mxu0
    %v219 = vadd.f32 %v30, %v218
    %220 = vmatmul.f32.gmra.mxu0 %v49
    %v221 = vpop.f32.mrf.mxu0
    %v222 = vadd.f32 %v30, %v221
    %223 = vmatmul.f32.gmra.mxu0 %v52
    %v224 = vpop.f32.mrf.mxu0
    %v225 = vadd.f32 %v30, %v224
    %226 = vmatmul.f32.gmra.mxu0 %v55
    %v227 = vpop.f32.mrf.mxu0
    %v228 = vadd.f32 %v30, %v227
    %229 = vmatmul.f32.gmra.mxu0 %v58
    %v230 = vpop.f32.mrf.mxu0
    %v231 = vadd.f32 %v30, %v230
    %232 = vmatmul.f32.gmra.mxu0 %v61
    %v233 = vpop.f32.mrf.mxu0
    %v234 = vadd.f32 %v30, %v233
    %235 = vmatmul.f32.gmra.mxu0 %v64
    %v236 = vpop.f32.mrf.mxu0
    %v237 = vadd.f32 %v30, %v236
    %238 = vmatmul.f32.gmra.mxu0 %v67
    %v239 = vpop.f32.mrf.mxu0
    %v240 = vadd.f32 %v30, %v239
    %241 = vdwg.mxu0
    %242 = vst [vmem:[#allocation2] sm:$0xff] %v96
    %243 = vst [vmem:[#allocation2 + $0x8] sm:$0xff] %v137
    %244 = vst [vmem:[#allocation2 + $0x10] sm:$0xff] %v178
    %245 = vst [vmem:[#allocation2 + $0x18] sm:$0xff] %v219
    %246 = vst [vmem:[#allocation2 + $0x20] sm:$0xff] %v99
    %247 = vst [vmem:[#allocation2 + $0x28] sm:$0xff] %v140
    %248 = vst [vmem:[#allocation2 + $0x30] sm:$0xff] %v181
    %249 = vst [vmem:[#allocation2 + $0x38] sm:$0xff] %v222
    %250 = vst [vmem:[#allocation2 + $0x40] sm:$0xff] %v102
    %251 = vst [vmem:[#allocation2 + $0x48] sm:$0xff] %v143
    %252 = vst [vmem:[#allocation2 + $0x50] sm:$0xff] %v184
    %253 = vst [vmem:[#allocation2 + $0x58] sm:$0xff] %v225
    %254 = vst [vmem:[#allocation2 + $0x60] sm:$0xff] %v105
    %255 = vst [vmem:[#allocation2 + $0x68] sm:$0xff] %v146
    %256 = vst [vmem:[#allocation2 + $0x70] sm:$0xff] %v187
    %257 = vst [vmem:[#allocation2 + $0x78] sm:$0xff] %v228
    %258 = vst [vmem:[#allocation2 + $0x80] sm:$0xff] %v108
    %259 = vst [vmem:[#allocation2 + $0x88] sm:$0xff] %v149
    %260 = vst [vmem:[#allocation2 + $0x90] sm:$0xff] %v190
    %261 = vst [vmem:[#allocation2 + $0x98] sm:$0xff] %v231
    %262 = vst [vmem:[#allocation2 + $0xa0] sm:$0xff] %v111
    %263 = vst [vmem:[#allocation2 + $0xa8] sm:$0xff] %v152
    %264 = vst [vmem:[#allocation2 + $0xb0] sm:$0xff] %v193
    %265 = vst [vmem:[#allocation2 + $0xb8] sm:$0xff] %v234
    %266 = vst [vmem:[#allocation2 + $0xc0] sm:$0xff] %v114
    %267 = vst [vmem:[#allocation2 + $0xc8] sm:$0xff] %v155
    %268 = vst [vmem:[#allocation2 + $0xd0] sm:$0xff] %v196
    %269 = vst [vmem:[#allocation2 + $0xd8] sm:$0xff] %v237
    %270 = vst [vmem:[#allocation2 + $0xe0] sm:$0xff] %v117
    %271 = vst [vmem:[#allocation2 + $0xe8] sm:$0xff] %v158
    %272 = vst [vmem:[#allocation2 + $0xf0] sm:$0xff] %v199
    %273 = vst [vmem:[#allocation2 + $0xf8] sm:$0xff] %v240
    // Predicated region
    $region14: #{tpu_custom_call.1} parent=1 // pred_check
      _
    $region15: #{tpu_custom_call.1} parent=1 // pred_check_branch
      %275 = sbr.rel (0) target = $region17
    $region16: #{tpu_custom_call.1} parent=1 // pred_region
      %277 = vsyncadd [#allocation3], 0
      %s278 = sshll.u32 [#allocation2], 4
      %s279 = int_to_ptr.vmem [resolvable:$true] %s278
      %s280 = sshll.u32 %s3, 4
      %s281 = int_to_ptr.hbm [resolvable:$true] %s280
      %286 = dma.vmem_to_hbm [thread:$0]  %s279, 4096, %s281, [#allocation3], 512, 512, 32
    $region17: #{tpu_custom_call.1} parent=1 // pred_fallthru
      _
    // Predicated region
    $region18: #{tpu_custom_call.1} parent=1 // pred_check
      _
    $region19: #{tpu_custom_call.1} parent=1 // pred_check_branch
      %288 = sbr.rel (0) target = $region21
    $region20: #{tpu_custom_call.1} parent=1 // pred_region
      %290 = dma.done [#allocation3], 4096
    $region21: #{tpu_custom_call.1} parent=1 // pred_fallthru
      _
    %291 = vsyncpa [#allocation3], 1

</llo_original>
